<compile_context>
chip_gen: v7x
topology: tpu7x:2x2x1
jax: 0.10.0
libtpu: 0.0.40
codegen_flags: <defaults>
</compile_context>

<pallas_src>
import jax
import jax.numpy as jnp
from jax import lax
from jax.experimental import pallas as pl
from jax.experimental.pallas import tpu as pltpu


def fused_loss_kernel(c_ref, v_ref, out_ref):
    c = c_ref[...]                                      # [B, N, D]  (current2, f32)
    v = v_ref[...]                                      # [B, N, D]  (voltage2, f32)
    B, N, D = c.shape
    M = B * N

    # ---- one gram for everything: X = [cf; vf], G = X @ X^T -----------------
    cf = c.reshape(M, D)                                # layout-free leading-dim merge
    vf = v.reshape(M, D)
    X = jnp.concatenate([cf, vf], axis=0)               # (2M, D), sublane-aligned concat
    G = lax.dot_general(X, X,
                        dimension_numbers=(((1,), (1,)), ((), ())),
                        preferred_element_type=jnp.float32)          # (2M, 2M)

    # -------------------------- SimSelfLoss ----------------------------------
    row = lax.broadcasted_iota(jnp.int32, (N, N), 0)
    col = lax.broadcasted_iota(jnp.int32, (N, N), 1)
    offdiag = (row != col)[None, :, :]                   # (1, N, N)

    def simself(s, base):
        # Inverse L2 norms over feature dim.  torch reference divides by the raw
        # norm (no eps clamp), so we intentionally match that behaviour.
        inv = lax.rsqrt(jnp.sum(s * s, axis=2))          # (B, N)
        # The B normalized grams are the diagonal N x N blocks of G at `base`.
        sims = jnp.stack(
            [G[base + b * N: base + (b + 1) * N,
               base + b * N: base + (b + 1) * N] for b in range(B)],
            axis=0)                                      # (B, N, N)
        sims = sims * (inv[:, :, None] * inv[:, None, :])
        sims = jnp.where(offdiag, sims, 0.0)             # zero the diagonal
        # torch.std(sim, dim=0) uses Bessel correction (ddof=1); needs B >= 2.
        mean = jnp.mean(sims, axis=0, keepdims=True)
        var = jnp.sum((sims - mean) ** 2, axis=0) / jnp.float32(B - 1)   # (N, N)
        # mean over ALL N*N entries (zero-std diagonal included), as in torch.
        return jnp.mean(jnp.sqrt(var)) * (25.0 / 16.0) * 100.0

    loss11 = simself(c, 0)
    loss12 = simself(v, M)

    # ------------------------- ContrastiveLoss -------------------------------
    logits_c = G[:M, M:]                                 # cf @ vf^T ; logits_v == logits_c.T
    rows = lax.broadcasted_iota(jnp.int32, (M, M), 0)
    cols = lax.broadcasted_iota(jnp.int32, (M, M), 1)

    # Shared global max -> single exp pass reused by both CE directions.
    gmax = jnp.max(logits_c, axis=(0, 1), keepdims=True)            # (1, 1)
    E = jnp.exp(logits_c - gmax)                                     # (M, M)

    # labels[i] = i % N  (arange(N).repeat(B))
    # CE(logits_current): picked element of row i is logits_c[i, i % N].
    lse_row = jnp.log(jnp.sum(E, axis=1, keepdims=True)) + gmax      # (M, 1)
    picked_row = jnp.sum(jnp.where(cols == rows % N, logits_c, 0.0),
                         axis=1, keepdims=True)                      # (M, 1)
    ce_c = jnp.mean(lse_row - picked_row)

    # CE(logits_voltage) == column-wise CE on logits_c: picked of column i is
    # logits_c[i % N, i]; column LSE over axis=0.
    lse_col = jnp.log(jnp.sum(E, axis=0, keepdims=True)) + gmax      # (1, M)
    picked_col = jnp.sum(jnp.where(rows == cols % N, logits_c, 0.0),
                         axis=0, keepdims=True)                      # (1, M)
    ce_v = jnp.mean(lse_col - picked_col)

    loss2 = 0.5 * (ce_c + ce_v)

    out_ref[0, 0] = loss11
    out_ref[0, 1] = loss12
    out_ref[0, 2] = loss2


def my_loss1_level2(current1, voltage1, current2, voltage2):
    # current1 / voltage1 are unused in the reference forward pass.
    if current2.dtype != jnp.float32:
        current2 = current2.astype(jnp.float32)
    if voltage2.dtype != jnp.float32:
        voltage2 = voltage2.astype(jnp.float32)

    B, N, D = current2.shape
    M = B * N
    cost = pl.CostEstimate(
        flops=2 * (2 * M) * (2 * M) * D,                 # single (2M,2M,D) gram
        transcendentals=M * M + 2 * M + 2 * B * N + 2 * N * N,
        bytes_accessed=2 * B * N * D * 4 + 3 * 4,
    )
    out = pl.pallas_call(
        fused_loss_kernel,
        out_shape=jax.ShapeDtypeStruct((1, 3), jnp.float32),
        in_specs=[pl.BlockSpec(memory_space=pltpu.MemorySpace.VMEM),
                  pl.BlockSpec(memory_space=pltpu.MemorySpace.VMEM)],
        out_specs=pl.BlockSpec(memory_space=pltpu.MemorySpace.SMEM),
        cost_estimate=cost,
    )(current2, voltage2)
    return out[0, 0], out[0, 1], out[0, 2]


if __name__ == "__main__":
    key = jax.random.PRNGKey(0)
    k1, k2, k3, k4 = jax.random.split(key, 4)
    B, N, D = 2, 8, 32          # batch, num_cmg, feature
    current1 = jax.random.normal(k1, (B, N, D), dtype=jnp.float32)
    voltage1 = jax.random.normal(k2, (B, N, D), dtype=jnp.float32)
    current2 = jax.random.normal(k3, (B, N, D), dtype=jnp.float32)
    voltage2 = jax.random.normal(k4, (B, N, D), dtype=jnp.float32)

    loss11, loss12, loss2 = my_loss1_level2(current1, voltage1,
                                            current2, voltage2)
    jax.block_until_ready((loss11, loss12, loss2))
    print("KERNEL_OK")
</pallas_src>

<mosaic_0001>
module attributes {stable_mosaic.version = 11 : i64} {
  func.func @fused_loss_kernel(%arg0: memref<2x8x32xf32, #tpu.memory_space<vmem>>, %arg1: memref<2x8x32xf32, #tpu.memory_space<vmem>>, %arg2: memref<1x3xf32, #tpu.memory_space<smem>>) attributes {dimension_semantics = [], scalar_prefetch = 0 : i64, scratch_operands = 0 : i64, tpu.core_type = #tpu.core_type<tc>} {
    %c0 = arith.constant 0 : index
    %c0_0 = arith.constant 0 : index
    %c0_1 = arith.constant 0 : index
    %0 = vector.load %arg0[%c0, %c0_0, %c0_1] : memref<2x8x32xf32, #tpu.memory_space<vmem>>, vector<2x8x32xf32>
    %c0_2 = arith.constant 0 : index
    %c0_3 = arith.constant 0 : index
    %c0_4 = arith.constant 0 : index
    %1 = vector.load %arg1[%c0_2, %c0_3, %c0_4] : memref<2x8x32xf32, #tpu.memory_space<vmem>>, vector<2x8x32xf32>
    %2 = vector.shape_cast %0 : vector<2x8x32xf32> to vector<16x32xf32>
    %3 = vector.shape_cast %1 : vector<2x8x32xf32> to vector<16x32xf32>
    %4 = tpu.concatenate %2, %3 in 0 : vector<16x32xf32>, vector<16x32xf32> -> vector<32x32xf32>
    %cst = arith.constant dense<0.000000e+00> : vector<32x32xf32>
    %5 = tpu.matmul %4, %4, %cst {dimension_numbers = #tpu.dot_dimension_numbers<[1], [1], [0], [0], [0, 0, 1, 0], [], []>} : vector<32x32xf32>, vector<32x32xf32>, vector<32x32xf32> -> vector<32x32xf32>
    %6 = tpu.iota {dimensions = array<i32: 0>} : vector<8x8xi32>
    %7 = tpu.iota {dimensions = array<i32: 1>} : vector<8x8xi32>
    %8 = arith.cmpi ne, %6, %7 : vector<8x8xi32>
    %9 = vector.shape_cast %8 : vector<8x8xi1> to vector<1x8x8xi1>
    %10 = arith.mulf %0, %0 : vector<2x8x32xf32>
    %cst_5 = arith.constant dense<0.000000e+00> : vector<2x8xf32>
    %11 = vector.multi_reduction <add>, %10, %cst_5 [2] : vector<2x8x32xf32> to vector<2x8xf32>
    %12 = math.rsqrt %11 : vector<2x8xf32>
    %13 = vector.extract_strided_slice %5 {offsets = [0, 0], sizes = [8, 8], strides = [1, 1]} : vector<32x32xf32> to vector<8x8xf32>
    %14 = vector.extract_strided_slice %5 {offsets = [8, 8], sizes = [8, 8], strides = [1, 1]} : vector<32x32xf32> to vector<8x8xf32>
    %15 = vector.shape_cast %13 : vector<8x8xf32> to vector<1x8x8xf32>
    %16 = vector.shape_cast %14 : vector<8x8xf32> to vector<1x8x8xf32>
    %17 = tpu.concatenate %15, %16 in 0 : vector<1x8x8xf32>, vector<1x8x8xf32> -> vector<2x8x8xf32>
    %18 = vector.shape_cast %12 : vector<2x8xf32> to vector<2x8x1xf32>
    %19 = vector.shape_cast %12 : vector<2x8xf32> to vector<2x1x8xf32>
    %20 = vector.broadcast %18 : vector<2x8x1xf32> to vector<2x8x8xf32>
    %21 = vector.broadcast %19 : vector<2x1x8xf32> to vector<2x8x8xf32>
    %22 = arith.mulf %20, %21 : vector<2x8x8xf32>
    %23 = arith.mulf %17, %22 : vector<2x8x8xf32>
    %cst_6 = arith.constant 0.000000e+00 : f32
    %24 = vector.shape_cast %9 : vector<1x8x8xi1> to vector<1x8x8xi1>
    %25 = vector.broadcast %24 : vector<1x8x8xi1> to vector<2x8x8xi1>
    %26 = vector.broadcast %cst_6 : f32 to vector<2x8x8xf32>
    %27 = arith.select %25, %23, %26 : vector<2x8x8xi1>, vector<2x8x8xf32>
    %cst_7 = arith.constant dense<0.000000e+00> : vector<8x8xf32>
    %28 = vector.multi_reduction <add>, %27, %cst_7 [0] : vector<2x8x8xf32> to vector<8x8xf32>
    %29 = vector.shape_cast %28 : vector<8x8xf32> to vector<1x8x8xf32>
    %cst_8 = arith.constant 2.000000e+00 : f32
    %30 = vector.broadcast %cst_8 : f32 to vector<1x8x8xf32>
    %31 = arith.divf %29, %30 : vector<1x8x8xf32>
    %32 = vector.broadcast %31 : vector<1x8x8xf32> to vector<2x8x8xf32>
    %33 = arith.subf %27, %32 : vector<2x8x8xf32>
    %34 = arith.mulf %33, %33 : vector<2x8x8xf32>
    %cst_9 = arith.constant dense<0.000000e+00> : vector<8x8xf32>
    %35 = vector.multi_reduction <add>, %34, %cst_9 [0] : vector<2x8x8xf32> to vector<8x8xf32>
    %cst_10 = arith.constant 1.000000e+00 : f32
    %36 = vector.broadcast %cst_10 : f32 to vector<8x8xf32>
    %37 = arith.divf %35, %36 : vector<8x8xf32>
    %38 = math.sqrt %37 : vector<8x8xf32>
    %39 = vector.shape_cast %38 : vector<8x8xf32> to vector<1x8x8xf32>
    %cst_11 = arith.constant dense<0.000000e+00> : vector<1xf32>
    %40 = vector.multi_reduction <add>, %39, %cst_11 [1, 2] : vector<1x8x8xf32> to vector<1xf32>
    %41 = vector.shape_cast %40 : vector<1xf32> to vector<1x1x1xf32>
    %42 = vector.extract %41[0, 0, 0] : f32 from vector<1x1x1xf32>
    %cst_12 = arith.constant 6.400000e+01 : f32
    %43 = arith.divf %42, %cst_12 : f32
    %cst_13 = arith.constant 1.562500e+00 : f32
    %44 = arith.mulf %43, %cst_13 : f32
    %cst_14 = arith.constant 1.000000e+02 : f32
    %45 = arith.mulf %44, %cst_14 : f32
    %46 = arith.mulf %1, %1 : vector<2x8x32xf32>
    %cst_15 = arith.constant dense<0.000000e+00> : vector<2x8xf32>
    %47 = vector.multi_reduction <add>, %46, %cst_15 [2] : vector<2x8x32xf32> to vector<2x8xf32>
    %48 = math.rsqrt %47 : vector<2x8xf32>
    %49 = vector.extract_strided_slice %5 {offsets = [16, 16], sizes = [8, 8], strides = [1, 1]} : vector<32x32xf32> to vector<8x8xf32>
    %50 = vector.extract_strided_slice %5 {offsets = [24, 24], sizes = [8, 8], strides = [1, 1]} : vector<32x32xf32> to vector<8x8xf32>
    %51 = vector.shape_cast %49 : vector<8x8xf32> to vector<1x8x8xf32>
    %52 = vector.shape_cast %50 : vector<8x8xf32> to vector<1x8x8xf32>
    %53 = tpu.concatenate %51, %52 in 0 : vector<1x8x8xf32>, vector<1x8x8xf32> -> vector<2x8x8xf32>
    %54 = vector.shape_cast %48 : vector<2x8xf32> to vector<2x8x1xf32>
    %55 = vector.shape_cast %48 : vector<2x8xf32> to vector<2x1x8xf32>
    %56 = vector.broadcast %54 : vector<2x8x1xf32> to vector<2x8x8xf32>
    %57 = vector.broadcast %55 : vector<2x1x8xf32> to vector<2x8x8xf32>
    %58 = arith.mulf %56, %57 : vector<2x8x8xf32>
    %59 = arith.mulf %53, %58 : vector<2x8x8xf32>
    %cst_16 = arith.constant 0.000000e+00 : f32
    %60 = vector.shape_cast %9 : vector<1x8x8xi1> to vector<1x8x8xi1>
    %61 = vector.broadcast %60 : vector<1x8x8xi1> to vector<2x8x8xi1>
    %62 = vector.broadcast %cst_16 : f32 to vector<2x8x8xf32>
    %63 = arith.select %61, %59, %62 : vector<2x8x8xi1>, vector<2x8x8xf32>
    %cst_17 = arith.constant dense<0.000000e+00> : vector<8x8xf32>
    %64 = vector.multi_reduction <add>, %63, %cst_17 [0] : vector<2x8x8xf32> to vector<8x8xf32>
    %65 = vector.shape_cast %64 : vector<8x8xf32> to vector<1x8x8xf32>
    %cst_18 = arith.constant 2.000000e+00 : f32
    %66 = vector.broadcast %cst_18 : f32 to vector<1x8x8xf32>
    %67 = arith.divf %65, %66 : vector<1x8x8xf32>
    %68 = vector.broadcast %67 : vector<1x8x8xf32> to vector<2x8x8xf32>
    %69 = arith.subf %63, %68 : vector<2x8x8xf32>
    %70 = arith.mulf %69, %69 : vector<2x8x8xf32>
    %cst_19 = arith.constant dense<0.000000e+00> : vector<8x8xf32>
    %71 = vector.multi_reduction <add>, %70, %cst_19 [0] : vector<2x8x8xf32> to vector<8x8xf32>
    %cst_20 = arith.constant 1.000000e+00 : f32
    %72 = vector.broadcast %cst_20 : f32 to vector<8x8xf32>
    %73 = arith.divf %71, %72 : vector<8x8xf32>
    %74 = math.sqrt %73 : vector<8x8xf32>
    %75 = vector.shape_cast %74 : vector<8x8xf32> to vector<1x8x8xf32>
    %cst_21 = arith.constant dense<0.000000e+00> : vector<1xf32>
    %76 = vector.multi_reduction <add>, %75, %cst_21 [1, 2] : vector<1x8x8xf32> to vector<1xf32>
    %77 = vector.shape_cast %76 : vector<1xf32> to vector<1x1x1xf32>
    %78 = vector.extract %77[0, 0, 0] : f32 from vector<1x1x1xf32>
    %cst_22 = arith.constant 6.400000e+01 : f32
    %79 = arith.divf %78, %cst_22 : f32
    %cst_23 = arith.constant 1.562500e+00 : f32
    %80 = arith.mulf %79, %cst_23 : f32
    %cst_24 = arith.constant 1.000000e+02 : f32
    %81 = arith.mulf %80, %cst_24 : f32
    %82 = vector.extract_strided_slice %5 {offsets = [0, 16], sizes = [16, 16], strides = [1, 1]} : vector<32x32xf32> to vector<16x16xf32>
    %83 = tpu.iota {dimensions = array<i32: 0>} : vector<16x16xi32>
    %84 = tpu.iota {dimensions = array<i32: 1>} : vector<16x16xi32>
    %85 = vector.shape_cast %82 : vector<16x16xf32> to vector<1x16x16xf32>
    %cst_25 = arith.constant dense<0xFF800000> : vector<1xf32>
    %86 = vector.multi_reduction <maximumf>, %85, %cst_25 [1, 2] : vector<1x16x16xf32> to vector<1xf32>
    %87 = vector.shape_cast %86 : vector<1xf32> to vector<1x1x1xf32>
    %88 = vector.extract %87[0, 0, 0] : f32 from vector<1x1x1xf32>
    %89 = vector.broadcast %88 : f32 to vector<1x1xf32>
    %90 = vector.broadcast %89 : vector<1x1xf32> to vector<16x16xf32>
    %91 = arith.subf %82, %90 : vector<16x16xf32>
    %92 = math.exp %91 : vector<16x16xf32>
    %cst_26 = arith.constant dense<0.000000e+00> : vector<16xf32>
    %93 = vector.multi_reduction <add>, %92, %cst_26 [1] : vector<16x16xf32> to vector<16xf32>
    %94 = vector.shape_cast %93 : vector<16xf32> to vector<16x1xf32>
    %95 = math.log %94 : vector<16x1xf32>
    %96 = vector.broadcast %89 : vector<1x1xf32> to vector<16x1xf32>
    %97 = arith.addf %95, %96 : vector<16x1xf32>
    %c8_i32 = arith.constant 8 : i32
    %c0_i32 = arith.constant 0 : i32
    %98 = arith.cmpi eq, %c8_i32, %c0_i32 : i32
    %c1_i32 = arith.constant 1 : i32
    %99 = arith.select %98, %c1_i32, %c8_i32 : i32
    %100 = vector.broadcast %99 : i32 to vector<16x16xi32>
    %101 = arith.remsi %83, %100 : vector<16x16xi32>
    %c0_i32_27 = arith.constant 0 : i32
    %102 = vector.broadcast %c0_i32_27 : i32 to vector<16x16xi32>
    %103 = arith.cmpi ne, %101, %102 : vector<16x16xi32>
    %c0_i32_28 = arith.constant 0 : i32
    %104 = vector.broadcast %c0_i32_28 : i32 to vector<16x16xi32>
    %105 = arith.cmpi slt, %101, %104 : vector<16x16xi32>
    %c0_i32_29 = arith.constant 0 : i32
    %106 = arith.cmpi slt, %99, %c0_i32_29 : i32
    %107 = vector.broadcast %106 : i1 to vector<16x16xi1>
    %108 = vector.broadcast %107 : vector<16x16xi1> to vector<16x16xi1>
    %109 = arith.xori %105, %108 : vector<16x16xi1>
    %110 = arith.andi %109, %103 : vector<16x16xi1>
    %111 = vector.broadcast %99 : i32 to vector<16x16xi32>
    %112 = arith.addi %101, %111 : vector<16x16xi32>
    %113 = arith.select %110, %112, %101 : vector<16x16xi1>, vector<16x16xi32>
    %114 = arith.cmpi eq, %84, %113 : vector<16x16xi32>
    %cst_30 = arith.constant 0.000000e+00 : f32
    %115 = vector.broadcast %cst_30 : f32 to vector<16x16xf32>
    %116 = arith.select %114, %82, %115 : vector<16x16xi1>, vector<16x16xf32>
    %cst_31 = arith.constant dense<0.000000e+00> : vector<16xf32>
    %117 = vector.multi_reduction <add>, %116, %cst_31 [1] : vector<16x16xf32> to vector<16xf32>
    %118 = vector.shape_cast %117 : vector<16xf32> to vector<16x1xf32>
    %119 = arith.subf %97, %118 : vector<16x1xf32>
    %120 = vector.shape_cast %119 : vector<16x1xf32> to vector<1x16x1xf32>
    %cst_32 = arith.constant dense<0.000000e+00> : vector<1xf32>
    %121 = vector.multi_reduction <add>, %120, %cst_32 [1, 2] : vector<1x16x1xf32> to vector<1xf32>
    %122 = vector.shape_cast %121 : vector<1xf32> to vector<1x1x1xf32>
    %123 = vector.extract %122[0, 0, 0] : f32 from vector<1x1x1xf32>
    %cst_33 = arith.constant 1.600000e+01 : f32
    %124 = arith.divf %123, %cst_33 : f32
    %cst_34 = arith.constant dense<0.000000e+00> : vector<16xf32>
    %125 = vector.multi_reduction <add>, %92, %cst_34 [0] : vector<16x16xf32> to vector<16xf32>
    %126 = vector.shape_cast %125 : vector<16xf32> to vector<1x16xf32>
    %127 = math.log %126 : vector<1x16xf32>
    %128 = vector.broadcast %89 : vector<1x1xf32> to vector<1x16xf32>
    %129 = arith.addf %127, %128 : vector<1x16xf32>
    %c8_i32_35 = arith.constant 8 : i32
    %c0_i32_36 = arith.constant 0 : i32
    %130 = arith.cmpi eq, %c8_i32_35, %c0_i32_36 : i32
    %c1_i32_37 = arith.constant 1 : i32
    %131 = arith.select %130, %c1_i32_37, %c8_i32_35 : i32
    %132 = vector.broadcast %131 : i32 to vector<16x16xi32>
    %133 = arith.remsi %84, %132 : vector<16x16xi32>
    %c0_i32_38 = arith.constant 0 : i32
    %134 = vector.broadcast %c0_i32_38 : i32 to vector<16x16xi32>
    %135 = arith.cmpi ne, %133, %134 : vector<16x16xi32>
    %c0_i32_39 = arith.constant 0 : i32
    %136 = vector.broadcast %c0_i32_39 : i32 to vector<16x16xi32>
    %137 = arith.cmpi slt, %133, %136 : vector<16x16xi32>
    %c0_i32_40 = arith.constant 0 : i32
    %138 = arith.cmpi slt, %131, %c0_i32_40 : i32
    %139 = vector.broadcast %138 : i1 to vector<16x16xi1>
    %140 = vector.broadcast %139 : vector<16x16xi1> to vector<16x16xi1>
    %141 = arith.xori %137, %140 : vector<16x16xi1>
    %142 = arith.andi %141, %135 : vector<16x16xi1>
    %143 = vector.broadcast %131 : i32 to vector<16x16xi32>
    %144 = arith.addi %133, %143 : vector<16x16xi32>
    %145 = arith.select %142, %144, %133 : vector<16x16xi1>, vector<16x16xi32>
    %146 = arith.cmpi eq, %83, %145 : vector<16x16xi32>
    %cst_41 = arith.constant 0.000000e+00 : f32
    %147 = vector.broadcast %cst_41 : f32 to vector<16x16xf32>
    %148 = arith.select %146, %82, %147 : vector<16x16xi1>, vector<16x16xf32>
    %cst_42 = arith.constant dense<0.000000e+00> : vector<16xf32>
    %149 = vector.multi_reduction <add>, %148, %cst_42 [0] : vector<16x16xf32> to vector<16xf32>
    %150 = vector.shape_cast %149 : vector<16xf32> to vector<1x16xf32>
    %151 = arith.subf %129, %150 : vector<1x16xf32>
    %152 = vector.shape_cast %151 : vector<1x16xf32> to vector<1x1x16xf32>
    %cst_43 = arith.constant dense<0.000000e+00> : vector<1xf32>
    %153 = vector.multi_reduction <add>, %152, %cst_43 [1, 2] : vector<1x1x16xf32> to vector<1xf32>
    %154 = vector.shape_cast %153 : vector<1xf32> to vector<1x1x1xf32>
    %155 = vector.extract %154[0, 0, 0] : f32 from vector<1x1x1xf32>
    %cst_44 = arith.constant 1.600000e+01 : f32
    %156 = arith.divf %155, %cst_44 : f32
    %157 = arith.addf %124, %156 : f32
    %cst_45 = arith.constant 5.000000e-01 : f32
    %158 = arith.mulf %cst_45, %157 : f32
    %c0_46 = arith.constant 0 : index
    %c0_47 = arith.constant 0 : index
    %159 = memref.load %arg2[%c0_46, %c0_47] : memref<1x3xf32, #tpu.memory_space<smem>>
    memref.store %45, %arg2[%c0_46, %c0_47] : memref<1x3xf32, #tpu.memory_space<smem>>
    %c0_48 = arith.constant 0 : index
    %c1 = arith.constant 1 : index
    %160 = memref.load %arg2[%c0_48, %c1] : memref<1x3xf32, #tpu.memory_space<smem>>
    memref.store %81, %arg2[%c0_48, %c1] : memref<1x3xf32, #tpu.memory_space<smem>>
    %c0_49 = arith.constant 0 : index
    %c2 = arith.constant 2 : index
    %161 = memref.load %arg2[%c0_49, %c2] : memref<1x3xf32, #tpu.memory_space<smem>>
    memref.store %158, %arg2[%c0_49, %c2] : memref<1x3xf32, #tpu.memory_space<smem>>
    return
  }
}

</mosaic_0001>

<llo_original>
// kernel: tpu_custom_call.1
$region0: #{tpu_custom_call.1}
  #allocation0 [shape = 'u32[]', space=smem, size = 0x4, offset = 0x4, fixed_abs, tag = 'smem constant byte address 0x4 - core index']
  #allocation1 [shape = 'u32[144,128]{1,0:T(1,128)}', space=vmem, size = 0x12000, scoped, tag = 'internal scratch']
  %s0 = inlined_call_operand.hbm [shape: f32[2,8,32], index: 0, kind: input, shape index: {}]
  %s1 = inlined_call_operand.hbm [shape: f32[2,8,32], index: 1, kind: input, shape index: {}]
  %s2 = inlined_call_operand.hbm [shape: f32[1,3], index: 2, kind: output, shape index: {}]
  %s3 = sld [smem:[#allocation0]]
  $region26: #{tpu_custom_call.1} parent=0
    _
  %s5 = ssub.s32 1, %s3
  %s6 = scalar_select 0, %s5, %s3
  $region1: #{tpu_custom_call.1} parent=0
    #allocation2 [shape = 'u8[8192]{0}', space=vmem, size = 0x2000, scoped, tag = 'input window, operand 0, single buffered']
    #allocation3 [shape = 's32[1]{0}', space=sflag, size = 0x4, scoped, tag = 'scoped memory for tpu_custom_call.1']
    #allocation4 [shape = 's32[1]{0}', space=sflag, size = 0x4, scoped, tag = 'scoped memory for tpu_custom_call.1']
    #allocation5 [shape = 'u8[8192]{0}', space=vmem, size = 0x2000, scoped, tag = 'input window, operand 1, single buffered']
    #allocation6 [shape = 's32[1]{0}', space=sflag, size = 0x4, scoped, tag = 'scoped memory for tpu_custom_call.1']
    #allocation7 [shape = 'u8[512]{0}', space=smem, size = 0x200, scoped, tag = 'output window, operand 0, single buffered']
    %7 = vsyncpa [#allocation3], 0
    %8 = vsyncpa [#allocation6], 0
    %9 = vsyncpa [#allocation4], 0
    // Predicated region
    $region2: #{tpu_custom_call.1} parent=1 // pred_check
      _
    $region3: #{tpu_custom_call.1} parent=1 // pred_check_branch
      %11 = sbr.rel (0) target = $region5
    $region4: #{tpu_custom_call.1} parent=1 // pred_region
      %s13 = ssub.s32 256, 256
      %14 = vsyncadd [#allocation3], %s13
      %s15 = sshll.u32 [#allocation2], 4
      %s16 = int_to_ptr.vmem [resolvable:$true] %s15
      %21 = dma.hbm_to_vmem [thread:$0]  %s0, 256, %s16, [#allocation3], 128, 128, 8
    $region5: #{tpu_custom_call.1} parent=1 // pred_fallthru
      _
    // Predicated region
    $region6: #{tpu_custom_call.1} parent=1 // pred_check
      _
    $region7: #{tpu_custom_call.1} parent=1 // pred_check_branch
      %23 = sbr.rel (0) target = $region9
    $region8: #{tpu_custom_call.1} parent=1 // pred_region
      %s25 = ssub.s32 256, 256
      %26 = vsyncadd [#allocation6], %s25
      %s27 = sshll.u32 [#allocation5], 4
      %s28 = int_to_ptr.vmem [resolvable:$true] %s27
      %33 = dma.hbm_to_vmem [thread:$0]  %s1, 256, %s28, [#allocation6], 128, 128, 8
    $region9: #{tpu_custom_call.1} parent=1 // pred_fallthru
      _
    // Predicated region
    $region10: #{tpu_custom_call.1} parent=1 // pred_check
      _
    $region11: #{tpu_custom_call.1} parent=1 // pred_check_branch
      %35 = sbr.rel (0) target = $region13
    $region12: #{tpu_custom_call.1} parent=1 // pred_region
      %36 = dma.done [#allocation3], 256
    $region13: #{tpu_custom_call.1} parent=1 // pred_fallthru
      _
    // Predicated region
    $region14: #{tpu_custom_call.1} parent=1 // pred_check
      _
    $region15: #{tpu_custom_call.1} parent=1 // pred_check_branch
      %38 = sbr.rel (0) target = $region17
    $region16: #{tpu_custom_call.1} parent=1 // pred_region
      %39 = dma.done [#allocation6], 256
    $region17: #{tpu_custom_call.1} parent=1 // pred_fallthru
      _
    %v40 = vld [vmem:[#allocation2] sm:$0xff]
    %v41 = vld [vmem:[#allocation2 + $0x8] sm:$0xff]
    %v42 = vld [vmem:[#allocation5] sm:$0xff]
    %v43 = vld [vmem:[#allocation5 + $0x8] sm:$0xff]
    %vm44 = vcmask 261120
    %v46 = vsel %vm44, %v40, 0
    %v49 = vsel %vm44, %v41, 0
    %v52 = vsel %vm44, %v42, 0
    %v55 = vsel %vm44, %v43, 0
    %57 = vmatprep.subr.mxu0 0.0
    %58 = vmatpush1.xpose.msra.mxu0 %v46
    %59 = vmatprep.subr.mxu0 0.0
    %60 = vmatpush1.xpose.msra.mxu0 %v49
    %61 = vmatprep.subr.mxu0 0.0
    %62 = vmatpush1.xpose.msra.mxu0 %v52
    %63 = vmatprep.subr.mxu0 0.0
    %64 = vmatpush1.xpose.msra.mxu0 %v55
    %65 = vmatprep.subr.mxu0 0.0
    %66 = vmatpush1.xpose.msra.mxu0 0.0
    %67 = vmatprep.subr.mxu0 0.0
    %68 = vmatpush1.xpose.msra.mxu0 0.0
    %69 = vmatprep.subr.mxu0 0.0
    %70 = vmatpush1.xpose.msra.mxu0 0.0
    %71 = vmatprep.subr.mxu0 0.0
    %72 = vmatpush1.xpose.msra.mxu0 0.0
    %73 = vmatprep.subr.mxu0 0.0
    %74 = vmatpush1.xpose.msra.mxu0 0.0
    %75 = vmatprep.subr.mxu0 0.0
    %76 = vmatpush1.xpose.msra.mxu0 0.0
    %77 = vmatprep.subr.mxu0 0.0
    %78 = vmatpush1.xpose.msra.mxu0 0.0
    %79 = vmatprep.subr.mxu0 0.0
    %80 = vmatpush1.xpose.msra.mxu0 0.0
    %81 = vmatprep.subr.mxu0 0.0
    %82 = vmatpush1.xpose.msra.mxu0 0.0
    %83 = vmatprep.subr.mxu0 0.0
    %84 = vmatpush1.xpose.msra.mxu0 0.0
    %85 = vmatprep.subr.mxu0 0.0
    %86 = vmatpush1.xpose.msra.mxu0 0.0
    %87 = vmatprep.subr.mxu0 0.0
    %88 = vmatpush1.xpose.msra.mxu0 0.0
    %89 = vmatprep.subr.mxu0 0.0
    %90 = vmatpush1.xpose.msra.mxu0 0.0
    %91 = vmatprep.subr.mxu0 0.0
    %92 = vmatpush1.xpose.msra.mxu0 0.0
    %93 = vmatprep.subr.mxu0 0.0
    %94 = vmatpush1.xpose.msra.mxu0 0.0
    %95 = vmatprep.subr.mxu0 0.0
    %96 = vmatpush1.xpose.msra.mxu0 0.0
    %97 = vmatprep.subr.mxu0 0.0
    %98 = vmatpush1.xpose.msra.mxu0 0.0
    %99 = vmatprep.subr.mxu0 0.0
    %100 = vmatpush1.xpose.msra.mxu0 0.0
    %101 = vmatprep.subr.mxu0 0.0
    %102 = vmatpush1.xpose.msra.mxu0 0.0
    %103 = vmatprep.subr.mxu0 0.0
    %104 = vmatpush1.xpose.msra.mxu0 0.0
    %105 = vmatprep.subr.mxu0 0.0
    %106 = vmatpush1.xpose.msra.mxu0 0.0
    %107 = vmatprep.subr.mxu0 0.0
    %108 = vmatpush1.xpose.msra.mxu0 0.0
    %109 = vmatprep.subr.mxu0 0.0
    %110 = vmatpush1.xpose.msra.mxu0 0.0
    %111 = vmatprep.subr.mxu0 0.0
    %112 = vmatpush1.xpose.msra.mxu0 0.0
    %113 = vmatprep.subr.mxu0 0.0
    %114 = vmatpush1.xpose.msra.mxu0 0.0
    %115 = vmatprep.subr.mxu0 0.0
    %116 = vmatpush1.xpose.msra.mxu0 0.0
    %117 = vmatprep.subr.mxu0 0.0
    %118 = vmatpush1.xpose.msra.mxu0 0.0
    %119 = vmatprep.subr.mxu0 0.0
    %120 = vmatpush1.xpose.msra.mxu0 0.0
    %121 = vmatprep.mubr.f32.mxu0 0.0
    %122 = vmatmul.mubr.f32.gmra.mrb[0].mxu0 %v46
    %v123 = vpop.f32.mrb[0].mxu0
    %v124 = vadd.f32 0.0, %v123
    %v125 = vpop.f32.mrb[0].mxu0
    %126 = vmatprep.mubr.f32.mxu0 0.0
    %127 = vmatmul.mubr.f32.gmra.mrb[0].mxu0 %v49
    %v128 = vpop.f32.mrb[0].mxu0
    %v129 = vadd.f32 0.0, %v128
    %v130 = vpop.f32.mrb[0].mxu0
    %131 = vmatprep.mubr.f32.mxu0 0.0
    %132 = vmatmul.mubr.f32.gmra.mrb[0].mxu0 %v52
    %v133 = vpop.f32.mrb[0].mxu0
    %v134 = vadd.f32 0.0, %v133
    %v135 = vpop.f32.mrb[0].mxu0
    %136 = vmatprep.mubr.f32.mxu0 0.0
    %137 = vmatmul.mubr.f32.gmra.mrb[0].mxu0 %v55
    %v138 = vpop.f32.mrb[0].mxu0
    %v139 = vadd.f32 0.0, %v138
    %v140 = vpop.f32.mrb[0].mxu0
    %141 = vdwg.mxu0
    %v142 = vlaneseq
    %v143 = vshrl.u32 %v142, 7
    %v144 = vlaneseq
    %v145 = vand.u32 %v144, 127
    %vm146 = vcmp.ne.s32.totalorder %v143, %v145
    %v147 = vmul.f32 %v40, %v40
    %v148 = vmul.f32 %v41, %v41
    %v149 = vsel %vm44, %v147, 0.0
    %150 = vadd.xlane.f32.xlu0 %v149
    %v151 = vpop.xlane.xlu0 %150
    %v152 = vsel %vm44, %v148, 0.0
    %153 = vadd.xlane.f32.xlu0 %v152
    %v154 = vpop.xlane.xlu0 %153
    %v155 = vrsqrt.pop %v151
    %v156 = vrsqrt.pop %v154
    %158 = vrot.lane.b32.xlu0 %v129, 120
    %v159 = vpop.permute.xlu0 %158
    %v163 = vlaneseq
    %v164 = vshrl.u32 %v163, 7
    %v165 = vsub.s32 %v145, %v164
    %v166 = vrot.slane %v155, %v165
    %v167 = vlaneseq
    %v168 = vshrl.u32 %v167, 7
    %v169 = vsub.s32 %v145, %v168
    %v170 = vrot.slane %v156, %v169
    %vm171 = vcmask 1042434
    %v172 = vsel %vm171, %v166, %v166
    %vm173 = vcmask 1043459
    %v174 = vsel %vm173, %v166, %v172
    %vm175 = vcmask 1044484
    %v176 = vsel %vm175, %v166, %v174
    %vm177 = vcmask 1045509
    %v178 = vsel %vm177, %v166, %v176
    %vm179 = vcmask 1046534
    %v180 = vsel %vm179, %v166, %v178
    %vm181 = vcmask 1047559
    %v182 = vsel %vm181, %v166, %v180
    %v183 = vsel %vm171, %v170, %v170
    %v184 = vsel %vm173, %v170, %v183
    %v185 = vsel %vm175, %v170, %v184
    %v186 = vsel %vm177, %v170, %v185
    %v187 = vsel %vm179, %v170, %v186
    %v188 = vsel %vm181, %v170, %v187
    %v191 = vmul.f32 %v155, %v182
    %v192 = vmul.f32 %v156, %v188
    %v193 = vmul.f32 %v124, %v191
    %v194 = vmul.f32 %v159, %v192
    %v195 = vsel %vm146, 1, 0
    %vm196 = vcmp.eq.s32.totalorder %v195, 1
    %v197 = vsel %vm196, %v193, 0.0
    %v198 = vsel %vm196, %v194, 0.0
    %vm199 = vcmask 64512
    %v200 = vsel %vm199, %v197, 0.0
    %v201 = vsel %vm199, %v198, 0.0
    %v202 = vadd.f32 %v200, %v201
    %v203 = vrcp.pop 2.0
    %v204 = vmul.f32 %v202, %v203
    %v205 = vsub.f32 %v197, %v204
    %v206 = vsub.f32 %v198, %v204
    %v207 = vmul.f32 %v205, %v205
    %v208 = vmul.f32 %v206, %v206
    %v209 = vsel %vm199, %v207, 0.0
    %v210 = vsel %vm199, %v208, 0.0
    %v211 = vadd.f32 %v209, %v210
    %v212 = vrsqrt.pop %v211
    %v213 = vmul.f32 %v211, %v212
    %vm214 = vcmp.eq.f32.partialorder %v211, inf
    %v215 = vsel %vm214, %v211, %v213
    %vm216 = vcmp.eq.f32.partialorder %v211, 0.0
    %v217 = vand.u32 %v211, 2147483648
    %v218 = vsel %vm216, %v217, %v215
    %v219 = vsel %vm199, %v218, 0.0
    %220 = vadd.xlane.f32.xlu0 %v219
    %v221 = vpop.xlane.xlu0 %220
    %v222 = vrot.slane %v221, 4
    %v223 = vadd.f32 %v221, %v222
    %v224 = vrot.slane %v223, 2
    %v225 = vadd.f32 %v223, %v224
    %v226 = vrot.slane %v225, 1
    %v227 = vadd.f32 %v225, %v226
    %s228 = vtos %v227
    %v229 = vrcp.pop 64.0
    %s230 = vtos %v229
    %s231 = smul.f32 %s228, %s230
    %s232 = smul.f32 %s231, 1.5625
    %s233 = smul.f32 %s232, 100.0
    %v234 = vmul.f32 %v42, %v42
    %v235 = vmul.f32 %v43, %v43
    %v236 = vsel %vm44, %v234, 0.0
    %237 = vadd.xlane.f32.xlu0 %v236
    %v238 = vpop.xlane.xlu0 %237
    %v239 = vsel %vm44, %v235, 0.0
    %240 = vadd.xlane.f32.xlu0 %v239
    %v241 = vpop.xlane.xlu0 %240
    %v242 = vrsqrt.pop %v238
    %v243 = vrsqrt.pop %v241
    %245 = vrot.lane.b32.xlu0 %v139, 120
    %v246 = vpop.permute.xlu0 %245
    %v250 = vlaneseq
    %v251 = vshrl.u32 %v250, 7
    %v252 = vsub.s32 %v145, %v251
    %v253 = vrot.slane %v242, %v252
    %v254 = vlaneseq
    %v255 = vshrl.u32 %v254, 7
    %v256 = vsub.s32 %v145, %v255
    %v257 = vrot.slane %v243, %v256
    %v258 = vsel %vm171, %v253, %v253
    %v259 = vsel %vm173, %v253, %v258
    %v260 = vsel %vm175, %v253, %v259
    %v261 = vsel %vm177, %v253, %v260
    %v262 = vsel %vm179, %v253, %v261
    %v263 = vsel %vm181, %v253, %v262
    %v264 = vsel %vm171, %v257, %v257
    %v265 = vsel %vm173, %v257, %v264
    %v266 = vsel %vm175, %v257, %v265
    %v267 = vsel %vm177, %v257, %v266
    %v268 = vsel %vm179, %v257, %v267
    %v269 = vsel %vm181, %v257, %v268
    %v272 = vmul.f32 %v242, %v263
    %v273 = vmul.f32 %v243, %v269
    %276 = vrot.lane.b32.xlu0 %v272, 16
    %v277 = vpop.permute.xlu0 %276
    %278 = vrot.lane.b32.xlu0 %v273, 16
    %v279 = vpop.permute.xlu0 %278
    %v282 = vmul.f32 %v134, %v277
    %v283 = vmul.f32 %v246, %v279
    %286 = vrot.lane.b32.xlu0 %v282, 112
    %v287 = vpop.permute.xlu0 %286
    %288 = vrot.lane.b32.xlu0 %v283, 112
    %v289 = vpop.permute.xlu0 %288
    %v292 = vsel %vm196, %v287, 0.0
    %v293 = vsel %vm196, %v289, 0.0
    %v294 = vsel %vm199, %v292, 0.0
    %v295 = vsel %vm199, %v293, 0.0
    %v296 = vadd.f32 %v294, %v295
    %v297 = vmul.f32 %v296, %v203
    %v298 = vsub.f32 %v292, %v297
    %v299 = vsub.f32 %v293, %v297
    %v300 = vmul.f32 %v298, %v298
    %v301 = vmul.f32 %v299, %v299
    %v302 = vsel %vm199, %v300, 0.0
    %v303 = vsel %vm199, %v301, 0.0
    %v304 = vadd.f32 %v302, %v303
    %v305 = vrsqrt.pop %v304
    %v306 = vmul.f32 %v304, %v305
    %vm307 = vcmp.eq.f32.partialorder %v304, inf
    %v308 = vsel %vm307, %v304, %v306
    %vm309 = vcmp.eq.f32.partialorder %v304, 0.0
    %v310 = vand.u32 %v304, 2147483648
    %v311 = vsel %vm309, %v310, %v308
    %v312 = vsel %vm199, %v311, 0.0
    %313 = vadd.xlane.f32.xlu0 %v312
    %v314 = vpop.xlane.xlu0 %313
    %v315 = vrot.slane %v314, 4
    %v316 = vadd.f32 %v314, %v315
    %v317 = vrot.slane %v316, 2
    %v318 = vadd.f32 %v316, %v317
    %v319 = vrot.slane %v318, 1
    %v320 = vadd.f32 %v318, %v319
    %s321 = vtos %v320
    %v322 = vrcp.pop 64.0
    %s323 = vtos %v322
    %s324 = smul.f32 %s321, %s323
    %s325 = smul.f32 %s324, 1.5625
    %s326 = smul.f32 %s325, 100.0
    %v327 = vadd.s32 %v143, 8
    %vm328 = vcmask 261248
    %v329 = vsel %vm328, %v124, -inf
    %v330 = vsel %vm328, %v129, -inf
    %v331 = vmax.f32 %v329, %v330
    %332 = vmax.xlane.f32.xlu0 %v331
    %v333 = vpop.xlane.xlu0 %332
    %v334 = vrot.slane %v333, 4
    %v335 = vmax.f32 %v333, %v334
    %v336 = vrot.slane %v335, 2
    %v337 = vmax.f32 %v335, %v336
    %v338 = vrot.slane %v337, 1
    %v339 = vmax.f32 %v337, %v338
    %s340 = vtos %v339
    %v341 = vstv %s340
    %v342 = vsub.f32 %v124, %v341
    %v343 = vsub.f32 %v129, %v341
    %v344 = vmul.f32 %v342, 1.442695
    %v345 = vpow.pop %v344
    %v346 = vmul.f32 %v343, 1.442695
    %v347 = vpow.pop %v346
    %350 = vrot.lane.b32.xlu0 %v345, 112
    %v351 = vpop.permute.xlu0 %350
    %352 = vrot.lane.b32.xlu0 %v347, 112
    %v353 = vpop.permute.xlu0 %352
    %vm356 = vcmask 130048
    %v357 = vsel %vm356, %v351, 0.0
    %358 = vadd.xlane.f32.xlu0 %v357
    %v359 = vpop.xlane.xlu0 %358
    %v360 = vsel %vm356, %v353, 0.0
    %361 = vadd.xlane.f32.xlu0 %v360
    %v362 = vpop.xlane.xlu0 %361
    %v363 = vlog2.pop %v359
    %v364 = vmul.f32 %v363, 0.6931472
    %v365 = vlog2.pop %v362
    %v366 = vmul.f32 %v365, 0.6931472
    %v367 = vadd.f32 %v364, %v341
    %v368 = vadd.f32 %v366, %v341
    %vm369 = vcmp.lt.s32.totalorder %v143, 0
    %v370 = vsub.s32 0, %v143
    %v371 = vsel %vm369, %v370, %v143
    %v372 = vshrl.u32 %v371, 3
    %v373 = vand.u32 %v371, 7
    %v374 = vsub.s32 0, %v373
    %v375 = vsel %vm369, %v374, %v373
    %vm376 = vcmp.lt.s32.totalorder %v327, 0
    %v377 = vsub.s32 0, %v327
    %v378 = vsel %vm376, %v377, %v327
    %v379 = vshrl.u32 %v378, 3
    %v380 = vand.u32 %v378, 7
    %v381 = vsub.s32 0, %v380
    %v382 = vsel %vm376, %v381, %v380
    %vm383 = vcmp.ne.s32.totalorder %v375, 0
    %vm384 = vcmp.ne.s32.totalorder %v382, 0
    %vm385 = vcmp.lt.s32.totalorder %v375, 0
    %vm386 = vcmp.lt.s32.totalorder %v382, 0
    %vm387 = vmand %vm385, %vm383
    %vm388 = vmand %vm386, %vm384
    %v389 = vadd.s32 %v375, 8
    %v390 = vadd.s32 %v382, 8
    %v391 = vsel %vm387, %v389, %v375
    %v392 = vsel %vm388, %v390, %v382
    %vm393 = vcmp.eq.s32.totalorder %v145, %v391
    %vm394 = vcmp.eq.s32.totalorder %v145, %v392
    %396 = vrot.lane.b32.xlu0 %v124, 112
    %v397 = vpop.permute.xlu0 %396
    %398 = vrot.lane.b32.xlu0 %v129, 112
    %v399 = vpop.permute.xlu0 %398
    %v402 = vsel %vm393, %v397, 0.0
    %v403 = vsel %vm394, %v399, 0.0
    %v404 = vsel %vm356, %v402, 0.0
    %405 = vadd.xlane.f32.xlu0 %v404
    %v406 = vpop.xlane.xlu0 %405
    %v407 = vsel %vm356, %v403, 0.0
    %408 = vadd.xlane.f32.xlu0 %v407
    %v409 = vpop.xlane.xlu0 %408
    %v410 = vsub.f32 %v367, %v406
    %v411 = vsub.f32 %v368, %v409
    %vm412 = vcmask 7168
    %v413 = vsel %vm412, %v410, 0.0
    %v414 = vsel %vm412, %v411, 0.0
    %v415 = vadd.f32 %v413, %v414
    %416 = vadd.xlane.f32.xlu0 %v415
    %v417 = vpop.xlane.xlu0 %416
    %v418 = vrot.slane %v417, 4
    %v419 = vadd.f32 %v417, %v418
    %v420 = vrot.slane %v419, 2
    %v421 = vadd.f32 %v419, %v420
    %v422 = vrot.slane %v421, 1
    %v423 = vadd.f32 %v421, %v422
    %s424 = vtos %v423
    %v425 = vrcp.pop 16.0
    %s426 = vtos %v425
    %s427 = smul.f32 %s424, %s426
    %v428 = vsel %vm328, %v345, 0.0
    %v429 = vsel %vm328, %v347, 0.0
    %v430 = vadd.f32 %v428, %v429
    %v431 = vrot.slane %v430, 4
    %v432 = vadd.f32 %v430, %v431
    %v433 = vrot.slane %v432, 2
    %v434 = vadd.f32 %v432, %v433
    %v435 = vrot.slane %v434, 1
    %v436 = vadd.f32 %v434, %v435
    %v437 = vlog2.pop %v436
    %v438 = vmul.f32 %v437, 0.6931472
    %v439 = vadd.f32 %v438, %v341
    %vm440 = vcmp.lt.s32.totalorder %v145, 0
    %v441 = vsub.s32 0, %v145
    %v442 = vsel %vm440, %v441, %v145
    %v443 = vshrl.u32 %v442, 3
    %v444 = vand.u32 %v442, 7
    %v445 = vsub.s32 0, %v444
    %v446 = vsel %vm440, %v445, %v444
    %vm447 = vcmp.ne.s32.totalorder %v446, 0
    %vm448 = vcmp.lt.s32.totalorder %v446, 0
    %vm449 = vmand %vm448, %vm447
    %v450 = vadd.s32 %v446, 8
    %v451 = vsel %vm449, %v450, %v446
    %vm452 = vcmp.eq.s32.totalorder %v143, %v451
    %vm453 = vcmp.eq.s32.totalorder %v327, %v451
    %v454 = vsel %vm452, %v397, 0.0
    %v455 = vsel %vm453, %v399, 0.0
    %v456 = vsel %vm356, %v454, 0.0
    %v457 = vsel %vm356, %v455, 0.0
    %v458 = vadd.f32 %v456, %v457
    %v459 = vrot.slane %v458, 4
    %v460 = vadd.f32 %v458, %v459
    %v461 = vrot.slane %v460, 2
    %v462 = vadd.f32 %v460, %v461
    %v463 = vrot.slane %v462, 1
    %v464 = vadd.f32 %v462, %v463
    %466 = vrot.lane.b32.xlu0 %v464, 16
    %v467 = vpop.permute.xlu0 %466
    %v469 = vsub.f32 %v439, %v467
    %471 = vrot.lane.b32.xlu0 %v469, 112
    %v472 = vpop.permute.xlu0 %471
    %vm474 = vcmask 122880
    %v475 = vsel %vm474, %v472, 0.0
    %476 = vadd.xlane.f32.xlu0 %v475
    %v477 = vpop.xlane.xlu0 %476
    %v478 = vrot.slane %v477, 4
    %v479 = vadd.f32 %v477, %v478
    %v480 = vrot.slane %v479, 2
    %v481 = vadd.f32 %v479, %v480
    %v482 = vrot.slane %v481, 1
    %v483 = vadd.f32 %v481, %v482
    %s484 = vtos %v483
    %v485 = vrcp.pop 16.0
    %s486 = vtos %v485
    %s487 = smul.f32 %s484, %s486
    %s488 = sadd.f32 %s427, %s487
    %s489 = smul.f32 %s488, 0.5
    %s490 = scalar_lea.smem [#allocation7], 0
    %491 = sst [smem:[%s490]] %s233
    %s492 = scalar_lea.smem [#allocation7], 1
    %493 = sst [smem:[%s492]] %s326
    %s494 = scalar_lea.smem [#allocation7], 2
    %495 = sst [smem:[%s494]] %s489
    // Predicated region
    $region18: #{tpu_custom_call.1} parent=1 // pred_check
      _
    $region19: #{tpu_custom_call.1} parent=1 // pred_check_branch
      %497 = sbr.rel (0) target = $region21
    $region20: #{tpu_custom_call.1} parent=1 // pred_region
      %s499 = ssub.s32 16, 16
      %500 = vsyncadd [#allocation4], %s499
      %503 = dma.smem_to_hbm [#allocation7], 16, %s2, [#allocation4]
    $region21: #{tpu_custom_call.1} parent=1 // pred_fallthru
      _
    // Predicated region
    $region22: #{tpu_custom_call.1} parent=1 // pred_check
      _
    $region23: #{tpu_custom_call.1} parent=1 // pred_check_branch
      %505 = sbr.rel (0) target = $region25
    $region24: #{tpu_custom_call.1} parent=1 // pred_region
      %506 = dma.done [#allocation4], 16
    $region25: #{tpu_custom_call.1} parent=1 // pred_fallthru
      _
    %507 = sfence
    %508 = vsyncpa [#allocation3], 1
    %509 = vsyncpa [#allocation6], 1
    %510 = vsyncpa [#allocation4], 1

</llo_original>
